<compile_context>
chip_gen: v5e
topology: v5e:2x2
jax: 0.10.0
libtpu: 0.0.40
codegen_flags: <defaults>
</compile_context>

<pallas_src>
import jax
import jax.numpy as jnp
from jax import lax
from jax.experimental import pallas as pl
from jax.experimental.pallas import tpu as pltpu


def dec_mlp_kernel(x_ref, w1_ref, b1_ref, w2_ref, b2_ref, w3_ref, b3_ref,
                   w4_ref, b4_ref, out_ref):
    # x_ref  : (tm, input_dim) bf16 — rows are flattened (B*T).
    # w*_ref : (in, out) bf16 resident weights; b*_ref: (1, out) f32.
    # out_ref: (tm, tag_size) f32; col 0 = nan_to_num(y_hat), col 1 = y_var.
    x = x_ref[...]

    h = jnp.dot(x, w1_ref[...], preferred_element_type=jnp.float32) + b1_ref[...]
    h = jnp.maximum(h, 0.0)
    # TODO(synk): dropout layers are treated as identity (inference/eval semantics).

    h = jnp.dot(h.astype(w2_ref.dtype), w2_ref[...],
                preferred_element_type=jnp.float32) + b2_ref[...]
    h = jnp.maximum(h, 0.0)

    h = jnp.dot(h.astype(w3_ref.dtype), w3_ref[...],
                preferred_element_type=jnp.float32) + b3_ref[...]
    h = jnp.maximum(h, 0.0)

    # lin4 (no activation): (tm, tag_size) in f32.
    stats = jnp.dot(h.astype(w4_ref.dtype), w4_ref[...],
                    preferred_element_type=jnp.float32) + b4_ref[...]

    # Fused epilogue: torch.nan_to_num applies only to column 0 (y_hat).
    col = lax.broadcasted_iota(jnp.int32, stats.shape, 1)
    out_ref[...] = jnp.where(col == 0, jnp.nan_to_num(stats),
                             stats).astype(out_ref.dtype)


def _choose_tm(m, tm_max):
    """Largest 128-multiple tile <= tm_max; prefer >=2 grid steps (v7x megacore)."""
    m128 = pl.cdiv(m, 128) * 128
    tm = max(128, (min(tm_max, m128) // 128) * 128)
    while tm > 128 and pl.cdiv(m, tm) < 2:
        tm -= 128
    return tm


def dec_mlp_forward(x_hat, r, params, *, tm_max=1024):
    """Returns (y_hat, y_var) matching dec_MLP.forward (eval mode)."""
    w1, b1, w2, b2, w3, b3, w4, b4 = params   # PyTorch layout: W (out, in), b (out,)
    B, T, x_dim = x_hat.shape
    r_dim = r.shape[1]
    input_dim = x_dim + r_dim
    H = w1.shape[0]
    tag_size = w4.shape[0]

    M = B * T
    tm = _choose_tm(M, tm_max)
    m_pad = pl.cdiv(M, tm) * tm

    # Wrapper-side layout plumbing (single cheap pass, NO transpose): fused
    # cat(x_hat, repeat(r)) flattened row-major to (m_pad, input_dim), bf16.
    r_mat = jnp.broadcast_to(r[:, None, :], (B, T, r_dim))
    feat = jnp.concatenate([x_hat, r_mat], axis=2).reshape(M, input_dim)
    feat = jnp.pad(feat, ((0, m_pad - M), (0, 0))).astype(jnp.bfloat16)

    # One-time weight prep: (in, out) bf16 for the MXU, (1, out) f32 biases.
    w1t = w1.T.astype(jnp.bfloat16)
    w2t = w2.T.astype(jnp.bfloat16)
    w3t = w3.T.astype(jnp.bfloat16)
    w4t = w4.T.astype(jnp.bfloat16)
    b1r = b1.reshape(1, H).astype(jnp.float32)
    b2r = b2.reshape(1, H).astype(jnp.float32)
    b3r = b3.reshape(1, H).astype(jnp.float32)
    b4r = b4.reshape(1, tag_size).astype(jnp.float32)

    def const(shape):
        return pl.BlockSpec(shape, lambda i: tuple(0 for _ in shape))

    stats = pl.pallas_call(
        dec_mlp_kernel,
        out_shape=jax.ShapeDtypeStruct((m_pad, tag_size), jnp.float32),
        grid_spec=pl.GridSpec(
            grid=(m_pad // tm,),
            in_specs=[
                pl.BlockSpec((tm, input_dim), lambda i: (i, 0)),  # activation tile
                const((input_dim, H)),                            # W1^T (resident)
                const((1, H)),                                    # b1
                const((H, H)),                                    # W2^T
                const((1, H)),                                    # b2
                const((H, H)),                                    # W3^T
                const((1, H)),                                    # b3
                const((H, tag_size)),                             # W4^T
                const((1, tag_size)),                             # b4
            ],
            out_specs=pl.BlockSpec((tm, tag_size), lambda i: (i, 0)),
        ),
        compiler_params=pltpu.CompilerParams(
            dimension_semantics=("parallel",)),
    )(feat, w1t, b1r, w2t, b2r, w3t, b3r, w4t, b4r)

    y_hat = stats[:M, 0].reshape(B, T)
    y_var = stats[:M, 1].reshape(B, T)
    return y_hat, y_var


def init_params(key, input_dim, hidden_size, tag_size):
    """Deterministic synthetic params, PyTorch layout: W (out, in), b (out,)."""
    ks = jax.random.split(key, 8)
    scale = 0.1
    w1 = scale * jax.random.normal(ks[0], (hidden_size, input_dim), jnp.float32)
    b1 = scale * jax.random.normal(ks[1], (hidden_size,), jnp.float32)
    w2 = scale * jax.random.normal(ks[2], (hidden_size, hidden_size), jnp.float32)
    b2 = scale * jax.random.normal(ks[3], (hidden_size,), jnp.float32)
    w3 = scale * jax.random.normal(ks[4], (hidden_size, hidden_size), jnp.float32)
    b3 = scale * jax.random.normal(ks[5], (hidden_size,), jnp.float32)
    w4 = scale * jax.random.normal(ks[6], (tag_size, hidden_size), jnp.float32)
    b4 = scale * jax.random.normal(ks[7], (tag_size,), jnp.float32)
    return (w1, b1, w2, b2, w3, b3, w4, b4)


def reference_forward(x_hat, r, params):
    """Pure-JAX f32 reference of the PyTorch forward for sanity checking."""
    w1, b1, w2, b2, w3, b3, w4, b4 = params
    B, T, _ = x_hat.shape
    r_mat = jnp.broadcast_to(r[:, None, :], (B, T, r.shape[1]))
    h = jnp.concatenate([x_hat, r_mat], axis=2)
    h = jax.nn.relu(h @ w1.T + b1)
    h = jax.nn.relu(h @ w2.T + b2)
    h = jax.nn.relu(h @ w3.T + b3)
    stats = h @ w4.T + b4
    return jnp.nan_to_num(stats[:, :, 0]), stats[:, :, 1]


if __name__ == "__main__":
    # Small shapes consistent with the module: batch=2, targets=8,
    # x_dim=16, r_dim=16 -> input_dim=32, hidden=32, tag_size=2.
    B, T = 2, 8
    x_dim, r_dim = 16, 16
    input_dim = x_dim + r_dim
    hidden_size = 32
    tag_size = 2

    key = jax.random.PRNGKey(0)
    k_x, k_r, k_p = jax.random.split(key, 3)
    x_hat = jax.random.normal(k_x, (B, T, x_dim), jnp.float32)
    r = jax.random.normal(k_r, (B, r_dim), jnp.float32)
    params = init_params(k_p, input_dim, hidden_size, tag_size)

    y_hat, y_var = dec_mlp_forward(x_hat, r, params)
    jax.block_until_ready((y_hat, y_var))

    y_hat_ref, y_var_ref = reference_forward(x_hat, r, params)
    assert y_hat.shape == (B, T) and y_var.shape == (B, T)
    # Tolerance accounts for bf16 matmul inputs (f32 accumulation) vs f32 reference.
    assert jnp.allclose(y_hat, y_hat_ref, atol=5e-2), "y_hat mismatch"
    assert jnp.allclose(y_var, y_var_ref, atol=5e-2), "y_var mismatch"

    print("KERNEL_OK")
</pallas_src>

<mosaic_0001>
module attributes {stable_mosaic.version = 11 : i64} {
  func.func @dec_mlp_kernel(%arg0: i32, %arg1: memref<128x32xbf16, #tpu.memory_space<vmem>>, %arg2: memref<32x32xbf16, #tpu.memory_space<vmem>>, %arg3: memref<1x32xf32, #tpu.memory_space<vmem>>, %arg4: memref<32x32xbf16, #tpu.memory_space<vmem>>, %arg5: memref<1x32xf32, #tpu.memory_space<vmem>>, %arg6: memref<32x32xbf16, #tpu.memory_space<vmem>>, %arg7: memref<1x32xf32, #tpu.memory_space<vmem>>, %arg8: memref<32x2xbf16, #tpu.memory_space<vmem>>, %arg9: memref<1x2xf32, #tpu.memory_space<vmem>>, %arg10: memref<128x2xf32, #tpu.memory_space<vmem>>) attributes {dimension_semantics = [#tpu.dimension_semantics<parallel>], iteration_bounds = array<i64: 1>, scalar_prefetch = 0 : i64, scratch_operands = 0 : i64, tpu.core_type = #tpu.core_type<tc>, window_params = [{transform_indices = @transform_0, window_bounds = array<i64: 128, 32>}, {pipeline_mode = #tpu.pipeline_mode<synchronous>, transform_indices = @transform_1, window_bounds = array<i64: 32, 32>}, {pipeline_mode = #tpu.pipeline_mode<synchronous>, transform_indices = @transform_2, window_bounds = array<i64: 1, 32>}, {pipeline_mode = #tpu.pipeline_mode<synchronous>, transform_indices = @transform_3, window_bounds = array<i64: 32, 32>}, {pipeline_mode = #tpu.pipeline_mode<synchronous>, transform_indices = @transform_4, window_bounds = array<i64: 1, 32>}, {pipeline_mode = #tpu.pipeline_mode<synchronous>, transform_indices = @transform_5, window_bounds = array<i64: 32, 32>}, {pipeline_mode = #tpu.pipeline_mode<synchronous>, transform_indices = @transform_6, window_bounds = array<i64: 1, 32>}, {pipeline_mode = #tpu.pipeline_mode<synchronous>, transform_indices = @transform_7, window_bounds = array<i64: 32, 2>}, {pipeline_mode = #tpu.pipeline_mode<synchronous>, transform_indices = @transform_8, window_bounds = array<i64: 1, 2>}, {transform_indices = @transform_9, window_bounds = array<i64: 128, 2>}]} {
    %c0 = arith.constant 0 : index
    %c0_0 = arith.constant 0 : index
    %0 = vector.load %arg1[%c0, %c0_0] : memref<128x32xbf16, #tpu.memory_space<vmem>>, vector<128x32xbf16>
    %c0_1 = arith.constant 0 : index
    %c0_2 = arith.constant 0 : index
    %1 = vector.load %arg2[%c0_1, %c0_2] : memref<32x32xbf16, #tpu.memory_space<vmem>>, vector<32x32xbf16>
    %cst = arith.constant dense<0.000000e+00> : vector<128x32xf32>
    %2 = tpu.matmul %0, %1, %cst {dimension_numbers = #tpu.dot_dimension_numbers<[1], [0], [0], [1], [0, 0, 1, 1], [], []>} : vector<128x32xbf16>, vector<32x32xbf16>, vector<128x32xf32> -> vector<128x32xf32>
    %c0_3 = arith.constant 0 : index
    %c0_4 = arith.constant 0 : index
    %3 = vector.load %arg3[%c0_3, %c0_4] : memref<1x32xf32, #tpu.memory_space<vmem>>, vector<1x32xf32>
    %4 = vector.broadcast %3 : vector<1x32xf32> to vector<128x32xf32>
    %5 = arith.addf %2, %4 : vector<128x32xf32>
    %cst_5 = arith.constant 0.000000e+00 : f32
    %6 = vector.broadcast %cst_5 : f32 to vector<128x32xf32>
    %7 = arith.maximumf %5, %6 : vector<128x32xf32>
    %8 = arith.truncf %7 : vector<128x32xf32> to vector<128x32xbf16>
    %c0_6 = arith.constant 0 : index
    %c0_7 = arith.constant 0 : index
    %9 = vector.load %arg4[%c0_6, %c0_7] : memref<32x32xbf16, #tpu.memory_space<vmem>>, vector<32x32xbf16>
    %cst_8 = arith.constant dense<0.000000e+00> : vector<128x32xf32>
    %10 = tpu.matmul %8, %9, %cst_8 {dimension_numbers = #tpu.dot_dimension_numbers<[1], [0], [0], [1], [0, 0, 1, 1], [], []>} : vector<128x32xbf16>, vector<32x32xbf16>, vector<128x32xf32> -> vector<128x32xf32>
    %c0_9 = arith.constant 0 : index
    %c0_10 = arith.constant 0 : index
    %11 = vector.load %arg5[%c0_9, %c0_10] : memref<1x32xf32, #tpu.memory_space<vmem>>, vector<1x32xf32>
    %12 = vector.broadcast %11 : vector<1x32xf32> to vector<128x32xf32>
    %13 = arith.addf %10, %12 : vector<128x32xf32>
    %cst_11 = arith.constant 0.000000e+00 : f32
    %14 = vector.broadcast %cst_11 : f32 to vector<128x32xf32>
    %15 = arith.maximumf %13, %14 : vector<128x32xf32>
    %16 = arith.truncf %15 : vector<128x32xf32> to vector<128x32xbf16>
    %c0_12 = arith.constant 0 : index
    %c0_13 = arith.constant 0 : index
    %17 = vector.load %arg6[%c0_12, %c0_13] : memref<32x32xbf16, #tpu.memory_space<vmem>>, vector<32x32xbf16>
    %cst_14 = arith.constant dense<0.000000e+00> : vector<128x32xf32>
    %18 = tpu.matmul %16, %17, %cst_14 {dimension_numbers = #tpu.dot_dimension_numbers<[1], [0], [0], [1], [0, 0, 1, 1], [], []>} : vector<128x32xbf16>, vector<32x32xbf16>, vector<128x32xf32> -> vector<128x32xf32>
    %c0_15 = arith.constant 0 : index
    %c0_16 = arith.constant 0 : index
    %19 = vector.load %arg7[%c0_15, %c0_16] : memref<1x32xf32, #tpu.memory_space<vmem>>, vector<1x32xf32>
    %20 = vector.broadcast %19 : vector<1x32xf32> to vector<128x32xf32>
    %21 = arith.addf %18, %20 : vector<128x32xf32>
    %cst_17 = arith.constant 0.000000e+00 : f32
    %22 = vector.broadcast %cst_17 : f32 to vector<128x32xf32>
    %23 = arith.maximumf %21, %22 : vector<128x32xf32>
    %24 = arith.truncf %23 : vector<128x32xf32> to vector<128x32xbf16>
    %c0_18 = arith.constant 0 : index
    %c0_19 = arith.constant 0 : index
    %25 = vector.load %arg8[%c0_18, %c0_19] : memref<32x2xbf16, #tpu.memory_space<vmem>>, vector<32x2xbf16>
    %cst_20 = arith.constant dense<0.000000e+00> : vector<128x2xf32>
    %26 = tpu.matmul %24, %25, %cst_20 {dimension_numbers = #tpu.dot_dimension_numbers<[1], [0], [0], [1], [0, 0, 1, 1], [], []>} : vector<128x32xbf16>, vector<32x2xbf16>, vector<128x2xf32> -> vector<128x2xf32>
    %c0_21 = arith.constant 0 : index
    %c0_22 = arith.constant 0 : index
    %27 = vector.load %arg9[%c0_21, %c0_22] : memref<1x2xf32, #tpu.memory_space<vmem>>, vector<1x2xf32>
    %28 = vector.broadcast %27 : vector<1x2xf32> to vector<128x2xf32>
    %29 = arith.addf %26, %28 : vector<128x2xf32>
    %30 = tpu.iota {dimensions = array<i32: 1>} : vector<128x2xi32>
    %c0_i32 = arith.constant 0 : i32
    %31 = vector.broadcast %c0_i32 : i32 to vector<128x2xi32>
    %32 = arith.cmpi eq, %30, %31 : vector<128x2xi32>
    %33 = arith.cmpf one, %29, %29 : vector<128x2xf32>
    %cst_23 = arith.constant 0.000000e+00 : f32
    %34 = vector.broadcast %cst_23 : f32 to vector<128x2xf32>
    %35 = arith.select %33, %34, %29 : vector<128x2xi1>, vector<128x2xf32>
    %cst_24 = arith.constant 0x7F800000 : f32
    %36 = vector.broadcast %cst_24 : f32 to vector<128x2xf32>
    %37 = arith.cmpf oeq, %35, %36 : vector<128x2xf32>
    %cst_25 = arith.constant 3.40282347E+38 : f32
    %38 = vector.broadcast %cst_25 : f32 to vector<128x2xf32>
    %39 = arith.select %37, %38, %35 : vector<128x2xi1>, vector<128x2xf32>
    %cst_26 = arith.constant 0xFF800000 : f32
    %40 = vector.broadcast %cst_26 : f32 to vector<128x2xf32>
    %41 = arith.cmpf oeq, %39, %40 : vector<128x2xf32>
    %cst_27 = arith.constant -3.40282347E+38 : f32
    %42 = vector.broadcast %cst_27 : f32 to vector<128x2xf32>
    %43 = arith.select %41, %42, %39 : vector<128x2xi1>, vector<128x2xf32>
    %44 = arith.select %32, %43, %29 : vector<128x2xi1>, vector<128x2xf32>
    %c0_28 = arith.constant 0 : index
    %c0_29 = arith.constant 0 : index
    %45 = vector.load %arg10[%c0_28, %c0_29] : memref<128x2xf32, #tpu.memory_space<vmem>>, vector<128x2xf32>
    tpu.vector_store %arg10[%c0_28, %c0_29], %44 {strides = array<i32>} : memref<128x2xf32, #tpu.memory_space<vmem>>, vector<128x2xf32>,
    return
  }
  func.func @transform_0(%arg0: i32) -> (i32, i32) {
    %c0_i32 = arith.constant 0 : i32
    %c0_i32_0 = arith.constant 0 : i32
    return %arg0, %c0_i32 : i32, i32
  }
  func.func @transform_1(%arg0: i32) -> (i32, i32) {
    %c0_i32 = arith.constant 0 : i32
    %c0_i32_0 = arith.constant 0 : i32
    %c0_i32_1 = arith.constant 0 : i32
    return %c0_i32, %c0_i32_0 : i32, i32
  }
  func.func @transform_2(%arg0: i32) -> (i32, i32) {
    %c0_i32 = arith.constant 0 : i32
    %c0_i32_0 = arith.constant 0 : i32
    %c0_i32_1 = arith.constant 0 : i32
    return %c0_i32, %c0_i32_0 : i32, i32
  }
  func.func @transform_3(%arg0: i32) -> (i32, i32) {
    %c0_i32 = arith.constant 0 : i32
    %c0_i32_0 = arith.constant 0 : i32
    %c0_i32_1 = arith.constant 0 : i32
    return %c0_i32, %c0_i32_0 : i32, i32
  }
  func.func @transform_4(%arg0: i32) -> (i32, i32) {
    %c0_i32 = arith.constant 0 : i32
    %c0_i32_0 = arith.constant 0 : i32
    %c0_i32_1 = arith.constant 0 : i32
    return %c0_i32, %c0_i32_0 : i32, i32
  }
  func.func @transform_5(%arg0: i32) -> (i32, i32) {
    %c0_i32 = arith.constant 0 : i32
    %c0_i32_0 = arith.constant 0 : i32
    %c0_i32_1 = arith.constant 0 : i32
    return %c0_i32, %c0_i32_0 : i32, i32
  }
  func.func @transform_6(%arg0: i32) -> (i32, i32) {
    %c0_i32 = arith.constant 0 : i32
    %c0_i32_0 = arith.constant 0 : i32
    %c0_i32_1 = arith.constant 0 : i32
    return %c0_i32, %c0_i32_0 : i32, i32
  }
  func.func @transform_7(%arg0: i32) -> (i32, i32) {
    %c0_i32 = arith.constant 0 : i32
    %c0_i32_0 = arith.constant 0 : i32
    %c0_i32_1 = arith.constant 0 : i32
    return %c0_i32, %c0_i32_0 : i32, i32
  }
  func.func @transform_8(%arg0: i32) -> (i32, i32) {
    %c0_i32 = arith.constant 0 : i32
    %c0_i32_0 = arith.constant 0 : i32
    %c0_i32_1 = arith.constant 0 : i32
    return %c0_i32, %c0_i32_0 : i32, i32
  }
  func.func @transform_9(%arg0: i32) -> (i32, i32) {
    %c0_i32 = arith.constant 0 : i32
    %c0_i32_0 = arith.constant 0 : i32
    return %arg0, %c0_i32 : i32, i32
  }
}

</mosaic_0001>

<llo_original>
// kernel: tpu_custom_call.1
$region0: #{tpu_custom_call.1}
  #allocation0 [shape = 'u32[]', space=smem, size = 0x4, offset = 0x4, fixed_abs, tag = 'smem constant byte address 0x4 - core index']
  #allocation1 [shape = 'u32[72,128]{1,0:T(1,128)}', space=vmem, size = 0x9000, scoped, tag = 'internal scratch']
  %s0 = inlined_call_operand.vmem [shape: bf16[128,32], index: 0, kind: input, shape index: {}]
  %s1 = inlined_call_operand.vmem [shape: bf16[32,32], index: 1, kind: input, shape index: {}]
  %s2 = inlined_call_operand.vmem [shape: f32[1,32], index: 2, kind: input, shape index: {}]
  %s3 = inlined_call_operand.vmem [shape: bf16[32,32], index: 3, kind: input, shape index: {}]
  %s4 = inlined_call_operand.vmem [shape: f32[1,32], index: 4, kind: input, shape index: {}]
  %s5 = inlined_call_operand.vmem [shape: bf16[32,32], index: 5, kind: input, shape index: {}]
  %s6 = inlined_call_operand.vmem [shape: f32[1,32], index: 6, kind: input, shape index: {}]
  %s7 = inlined_call_operand.vmem [shape: bf16[32,2], index: 7, kind: input, shape index: {}]
  %s8 = inlined_call_operand.vmem [shape: f32[1,2], index: 8, kind: input, shape index: {}]
  %s9 = inlined_call_operand.vmem [shape: f32[128,2], index: 9, kind: output, shape index: {}]
  %s10 = sld [smem:[#allocation0]]
  $region46: #{tpu_custom_call.1} parent=0
    _
  %s12 = ssub.s32 1, %s10
  %s13 = scalar_select 0, %s12, %s10
  // Predicated region
  $region2: #{tpu_custom_call.1} parent=0 // pred_check
    _
  $region3: #{tpu_custom_call.1} parent=0 // pred_check_branch
    %15 = sbr.rel (0) target = $region5
  $region4: #{tpu_custom_call.1} parent=0 // pred_region
    _
  $region5: #{tpu_custom_call.1} parent=0 // pred_fallthru
    _
  // Predicated region
  $region6: #{tpu_custom_call.1} parent=0 // pred_check
    _
  $region7: #{tpu_custom_call.1} parent=0 // pred_check_branch
    %17 = sbr.rel (0) target = $region9
  $region8: #{tpu_custom_call.1} parent=0 // pred_region
    _
  $region9: #{tpu_custom_call.1} parent=0 // pred_fallthru
    _
  // Predicated region
  $region10: #{tpu_custom_call.1} parent=0 // pred_check
    _
  $region11: #{tpu_custom_call.1} parent=0 // pred_check_branch
    %19 = sbr.rel (0) target = $region13
  $region12: #{tpu_custom_call.1} parent=0 // pred_region
    _
  $region13: #{tpu_custom_call.1} parent=0 // pred_fallthru
    _
  // Predicated region
  $region14: #{tpu_custom_call.1} parent=0 // pred_check
    _
  $region15: #{tpu_custom_call.1} parent=0 // pred_check_branch
    %21 = sbr.rel (0) target = $region17
  $region16: #{tpu_custom_call.1} parent=0 // pred_region
    _
  $region17: #{tpu_custom_call.1} parent=0 // pred_fallthru
    _
  // Predicated region
  $region18: #{tpu_custom_call.1} parent=0 // pred_check
    _
  $region19: #{tpu_custom_call.1} parent=0 // pred_check_branch
    %23 = sbr.rel (0) target = $region21
  $region20: #{tpu_custom_call.1} parent=0 // pred_region
    _
  $region21: #{tpu_custom_call.1} parent=0 // pred_fallthru
    _
  // Predicated region
  $region22: #{tpu_custom_call.1} parent=0 // pred_check
    _
  $region23: #{tpu_custom_call.1} parent=0 // pred_check_branch
    %25 = sbr.rel (0) target = $region25
  $region24: #{tpu_custom_call.1} parent=0 // pred_region
    _
  $region25: #{tpu_custom_call.1} parent=0 // pred_fallthru
    _
  // Predicated region
  $region26: #{tpu_custom_call.1} parent=0 // pred_check
    _
  $region27: #{tpu_custom_call.1} parent=0 // pred_check_branch
    %27 = sbr.rel (0) target = $region29
  $region28: #{tpu_custom_call.1} parent=0 // pred_region
    _
  $region29: #{tpu_custom_call.1} parent=0 // pred_fallthru
    _
  // Predicated region
  $region30: #{tpu_custom_call.1} parent=0 // pred_check
    _
  $region31: #{tpu_custom_call.1} parent=0 // pred_check_branch
    %29 = sbr.rel (0) target = $region33
  $region32: #{tpu_custom_call.1} parent=0 // pred_region
    _
  $region33: #{tpu_custom_call.1} parent=0 // pred_fallthru
    _
  // Predicated region
  $region34: #{tpu_custom_call.1} parent=0 // pred_check
    _
  $region35: #{tpu_custom_call.1} parent=0 // pred_check_branch
    %31 = sbr.rel (0) target = $region37
  $region36: #{tpu_custom_call.1} parent=0 // pred_region
    _
  $region37: #{tpu_custom_call.1} parent=0 // pred_fallthru
    _
  %v33 = vld [vmem:[%s0] sm:$0xf]
  %v34 = vld [vmem:[%s0 + $0x4] sm:$0xf]
  %v35 = vld [vmem:[%s0 + $0x8] sm:$0xf]
  %v36 = vld [vmem:[%s0 + $0xc] sm:$0xf]
  %v37 = vld [vmem:[%s0 + $0x10] sm:$0xf]
  %v38 = vld [vmem:[%s0 + $0x14] sm:$0xf]
  %v39 = vld [vmem:[%s0 + $0x18] sm:$0xf]
  %v40 = vld [vmem:[%s0 + $0x1c] sm:$0xf]
  %v41 = vld [vmem:[%s0 + $0x20] sm:$0xf]
  %v42 = vld [vmem:[%s0 + $0x24] sm:$0xf]
  %v43 = vld [vmem:[%s0 + $0x28] sm:$0xf]
  %v44 = vld [vmem:[%s0 + $0x2c] sm:$0xf]
  %v45 = vld [vmem:[%s0 + $0x30] sm:$0xf]
  %v46 = vld [vmem:[%s0 + $0x34] sm:$0xf]
  %v47 = vld [vmem:[%s0 + $0x38] sm:$0xf]
  %v48 = vld [vmem:[%s0 + $0x3c] sm:$0xf]
  %v49 = vld [vmem:[%s1] sm:$0xf]
  %v50 = vld [vmem:[%s1 + $0x4] sm:$0xf]
  %v51 = vld [vmem:[%s1 + $0x8] sm:$0xf]
  %v52 = vld [vmem:[%s1 + $0xc] sm:$0xf]
  %v53 = vld [vmem:[%s2] sm:$0x1]
  %v55 = vperm.slane %v53, 0
  %v73 = vunpack.c.l.b16 %v33
  %v74 = vunpack.c.l.b16 %v34
  %v75 = vunpack.c.l.b16 %v35
  %v76 = vunpack.c.l.b16 %v36
  %v77 = vunpack.c.l.b16 %v37
  %v78 = vunpack.c.l.b16 %v38
  %v79 = vunpack.c.l.b16 %v39
  %v80 = vunpack.c.l.b16 %v40
  %v81 = vunpack.c.l.b16 %v41
  %v82 = vunpack.c.l.b16 %v42
  %v83 = vunpack.c.l.b16 %v43
  %v84 = vunpack.c.l.b16 %v44
  %v85 = vunpack.c.l.b16 %v45
  %v86 = vunpack.c.l.b16 %v46
  %v87 = vunpack.c.l.b16 %v47
  %v88 = vunpack.c.l.b16 %v48
  %v89 = vpack.c.b16 %v74, %v73
  %v90 = vpack.c.b16 %v76, %v75
  %v91 = vpack.c.b16 %v78, %v77
  %v92 = vpack.c.b16 %v80, %v79
  %v93 = vpack.c.b16 %v82, %v81
  %v94 = vpack.c.b16 %v84, %v83
  %v95 = vpack.c.b16 %v86, %v85
  %v96 = vpack.c.b16 %v88, %v87
  %v101 = vunpack.c.l.b16 %v49
  %v102 = vunpack.c.l.b16 %v50
  %v103 = vunpack.c.l.b16 %v51
  %v104 = vunpack.c.l.b16 %v52
  %v105 = vpack.c.b16 %v102, %v101
  %v106 = vpack.c.b16 %v104, %v103
  %vm109 = vcmask 261120
  %v111 = vsel %vm109, %v89, 0
  %v114 = vsel %vm109, %v90, 0
  %v117 = vsel %vm109, %v91, 0
  %v120 = vsel %vm109, %v92, 0
  %v123 = vsel %vm109, %v93, 0
  %v126 = vsel %vm109, %v94, 0
  %v129 = vsel %vm109, %v95, 0
  %v132 = vsel %vm109, %v96, 0
  %134 = vmatpush.bf16.msra.mxu0 0
  %135 = vmatpush.bf16.msra.mxu0 0
  %136 = vmatpush.bf16.msra.mxu0 0
  %137 = vmatpush.bf16.msra.mxu0 0
  %138 = vmatpush.bf16.msra.mxu0 0
  %139 = vmatpush.bf16.msra.mxu0 0
  %140 = vmatpush.bf16.msra.mxu0 %v106
  %141 = vmatpush.bf16.msra.mxu0 %v105
  %142 = vmatmul.bf16.gmra.mxu0 %v111
  %v143 = vpop.f32.mrf.mxu0
  %v144 = vadd.f32 %v55, %v143
  %v145 = vpop.f32.mrf.mxu0
  %v146 = vadd.f32 %v55, %v145
  %147 = vmatmul.bf16.gmra.mxu0 %v114
  %v148 = vpop.f32.mrf.mxu0
  %v149 = vadd.f32 %v55, %v148
  %v150 = vpop.f32.mrf.mxu0
  %v151 = vadd.f32 %v55, %v150
  %152 = vmatmul.bf16.gmra.mxu0 %v117
  %v153 = vpop.f32.mrf.mxu0
  %v154 = vadd.f32 %v55, %v153
  %v155 = vpop.f32.mrf.mxu0
  %v156 = vadd.f32 %v55, %v155
  %157 = vmatmul.bf16.gmra.mxu0 %v120
  %v158 = vpop.f32.mrf.mxu0
  %v159 = vadd.f32 %v55, %v158
  %v160 = vpop.f32.mrf.mxu0
  %v161 = vadd.f32 %v55, %v160
  %162 = vmatmul.bf16.gmra.mxu0 %v123
  %v163 = vpop.f32.mrf.mxu0
  %v164 = vadd.f32 %v55, %v163
  %v165 = vpop.f32.mrf.mxu0
  %v166 = vadd.f32 %v55, %v165
  %167 = vmatmul.bf16.gmra.mxu0 %v126
  %v168 = vpop.f32.mrf.mxu0
  %v169 = vadd.f32 %v55, %v168
  %v170 = vpop.f32.mrf.mxu0
  %v171 = vadd.f32 %v55, %v170
  %172 = vmatmul.bf16.gmra.mxu0 %v129
  %v173 = vpop.f32.mrf.mxu0
  %v174 = vadd.f32 %v55, %v173
  %v175 = vpop.f32.mrf.mxu0
  %v176 = vadd.f32 %v55, %v175
  %177 = vmatmul.bf16.gmra.mxu0 %v132
  %v178 = vpop.f32.mrf.mxu0
  %v179 = vadd.f32 %v55, %v178
  %v180 = vpop.f32.mrf.mxu0
  %v181 = vadd.f32 %v55, %v180
  %182 = vdwg.mxu0
  %v183 = vmax.f32 %v144, 0.0
  %v184 = vmax.f32 %v146, 0.0
  %v185 = vmax.f32 %v149, 0.0
  %v186 = vmax.f32 %v151, 0.0
  %v187 = vmax.f32 %v154, 0.0
  %v188 = vmax.f32 %v156, 0.0
  %v189 = vmax.f32 %v159, 0.0
  %v190 = vmax.f32 %v161, 0.0
  %v191 = vmax.f32 %v164, 0.0
  %v192 = vmax.f32 %v166, 0.0
  %v193 = vmax.f32 %v169, 0.0
  %v194 = vmax.f32 %v171, 0.0
  %v195 = vmax.f32 %v174, 0.0
  %v196 = vmax.f32 %v176, 0.0
  %v197 = vmax.f32 %v179, 0.0
  %v198 = vmax.f32 %v181, 0.0
  %v199 = vpack.c.bf16 %v184, %v183
  %v200 = vpack.c.bf16 %v186, %v185
  %v201 = vpack.c.bf16 %v188, %v187
  %v202 = vpack.c.bf16 %v190, %v189
  %v203 = vpack.c.bf16 %v192, %v191
  %v204 = vpack.c.bf16 %v194, %v193
  %v205 = vpack.c.bf16 %v196, %v195
  %v206 = vpack.c.bf16 %v198, %v197
  %v207 = vld [vmem:[%s3] sm:$0xf]
  %v208 = vld [vmem:[%s3 + $0x4] sm:$0xf]
  %v209 = vld [vmem:[%s3 + $0x8] sm:$0xf]
  %v210 = vld [vmem:[%s3 + $0xc] sm:$0xf]
  %v211 = vld [vmem:[%s4] sm:$0x1]
  %v213 = vperm.slane %v211, 0
  %v219 = vunpack.c.l.b16 %v207
  %v220 = vunpack.c.l.b16 %v208
  %v221 = vunpack.c.l.b16 %v209
  %v222 = vunpack.c.l.b16 %v210
  %v223 = vpack.c.b16 %v220, %v219
  %v224 = vpack.c.b16 %v222, %v221
  %v228 = vsel %vm109, %v199, 0
  %v231 = vsel %vm109, %v200, 0
  %v234 = vsel %vm109, %v201, 0
  %v237 = vsel %vm109, %v202, 0
  %v240 = vsel %vm109, %v203, 0
  %v243 = vsel %vm109, %v204, 0
  %v246 = vsel %vm109, %v205, 0
  %v249 = vsel %vm109, %v206, 0
  %251 = vmatpush.bf16.msra.mxu0 0
  %252 = vmatpush.bf16.msra.mxu0 0
  %253 = vmatpush.bf16.msra.mxu0 0
  %254 = vmatpush.bf16.msra.mxu0 0
  %255 = vmatpush.bf16.msra.mxu0 0
  %256 = vmatpush.bf16.msra.mxu0 0
  %257 = vmatpush.bf16.msra.mxu0 %v224
  %258 = vmatpush.bf16.msra.mxu0 %v223
  %259 = vmatmul.bf16.gmra.mxu0 %v228
  %v260 = vpop.f32.mrf.mxu0
  %v261 = vadd.f32 %v213, %v260
  %v262 = vpop.f32.mrf.mxu0
  %v263 = vadd.f32 %v213, %v262
  %264 = vmatmul.bf16.gmra.mxu0 %v231
  %v265 = vpop.f32.mrf.mxu0
  %v266 = vadd.f32 %v213, %v265
  %v267 = vpop.f32.mrf.mxu0
  %v268 = vadd.f32 %v213, %v267
  %269 = vmatmul.bf16.gmra.mxu0 %v234
  %v270 = vpop.f32.mrf.mxu0
  %v271 = vadd.f32 %v213, %v270
  %v272 = vpop.f32.mrf.mxu0
  %v273 = vadd.f32 %v213, %v272
  %274 = vmatmul.bf16.gmra.mxu0 %v237
  %v275 = vpop.f32.mrf.mxu0
  %v276 = vadd.f32 %v213, %v275
  %v277 = vpop.f32.mrf.mxu0
  %v278 = vadd.f32 %v213, %v277
  %279 = vmatmul.bf16.gmra.mxu0 %v240
  %v280 = vpop.f32.mrf.mxu0
  %v281 = vadd.f32 %v213, %v280
  %v282 = vpop.f32.mrf.mxu0
  %v283 = vadd.f32 %v213, %v282
  %284 = vmatmul.bf16.gmra.mxu0 %v243
  %v285 = vpop.f32.mrf.mxu0
  %v286 = vadd.f32 %v213, %v285
  %v287 = vpop.f32.mrf.mxu0
  %v288 = vadd.f32 %v213, %v287
  %289 = vmatmul.bf16.gmra.mxu0 %v246
  %v290 = vpop.f32.mrf.mxu0
  %v291 = vadd.f32 %v213, %v290
  %v292 = vpop.f32.mrf.mxu0
  %v293 = vadd.f32 %v213, %v292
  %294 = vmatmul.bf16.gmra.mxu0 %v249
  %v295 = vpop.f32.mrf.mxu0
  %v296 = vadd.f32 %v213, %v295
  %v297 = vpop.f32.mrf.mxu0
  %v298 = vadd.f32 %v213, %v297
  %299 = vdwg.mxu0
  %v300 = vmax.f32 %v261, 0.0
  %v301 = vmax.f32 %v263, 0.0
  %v302 = vmax.f32 %v266, 0.0
  %v303 = vmax.f32 %v268, 0.0
  %v304 = vmax.f32 %v271, 0.0
  %v305 = vmax.f32 %v273, 0.0
  %v306 = vmax.f32 %v276, 0.0
  %v307 = vmax.f32 %v278, 0.0
  %v308 = vmax.f32 %v281, 0.0
  %v309 = vmax.f32 %v283, 0.0
  %v310 = vmax.f32 %v286, 0.0
  %v311 = vmax.f32 %v288, 0.0
  %v312 = vmax.f32 %v291, 0.0
  %v313 = vmax.f32 %v293, 0.0
  %v314 = vmax.f32 %v296, 0.0
  %v315 = vmax.f32 %v298, 0.0
  %v316 = vpack.c.bf16 %v301, %v300
  %v317 = vpack.c.bf16 %v303, %v302
  %v318 = vpack.c.bf16 %v305, %v304
  %v319 = vpack.c.bf16 %v307, %v306
  %v320 = vpack.c.bf16 %v309, %v308
  %v321 = vpack.c.bf16 %v311, %v310
  %v322 = vpack.c.bf16 %v313, %v312
  %v323 = vpack.c.bf16 %v315, %v314
  %v324 = vld [vmem:[%s5] sm:$0xf]
  %v325 = vld [vmem:[%s5 + $0x4] sm:$0xf]
  %v326 = vld [vmem:[%s5 + $0x8] sm:$0xf]
  %v327 = vld [vmem:[%s5 + $0xc] sm:$0xf]
  %v328 = vld [vmem:[%s6] sm:$0x1]
  %v330 = vperm.slane %v328, 0
  %v336 = vunpack.c.l.b16 %v324
  %v337 = vunpack.c.l.b16 %v325
  %v338 = vunpack.c.l.b16 %v326
  %v339 = vunpack.c.l.b16 %v327
  %v340 = vpack.c.b16 %v337, %v336
  %v341 = vpack.c.b16 %v339, %v338
  %v345 = vsel %vm109, %v316, 0
  %v348 = vsel %vm109, %v317, 0
  %v351 = vsel %vm109, %v318, 0
  %v354 = vsel %vm109, %v319, 0
  %v357 = vsel %vm109, %v320, 0
  %v360 = vsel %vm109, %v321, 0
  %v363 = vsel %vm109, %v322, 0
  %v366 = vsel %vm109, %v323, 0
  %368 = vmatpush.bf16.msra.mxu0 0
  %369 = vmatpush.bf16.msra.mxu0 0
  %370 = vmatpush.bf16.msra.mxu0 0
  %371 = vmatpush.bf16.msra.mxu0 0
  %372 = vmatpush.bf16.msra.mxu0 0
  %373 = vmatpush.bf16.msra.mxu0 0
  %374 = vmatpush.bf16.msra.mxu0 %v341
  %375 = vmatpush.bf16.msra.mxu0 %v340
  %376 = vmatmul.bf16.gmra.mxu0 %v345
  %v377 = vpop.f32.mrf.mxu0
  %v378 = vadd.f32 %v330, %v377
  %v379 = vpop.f32.mrf.mxu0
  %v380 = vadd.f32 %v330, %v379
  %381 = vmatmul.bf16.gmra.mxu0 %v348
  %v382 = vpop.f32.mrf.mxu0
  %v383 = vadd.f32 %v330, %v382
  %v384 = vpop.f32.mrf.mxu0
  %v385 = vadd.f32 %v330, %v384
  %386 = vmatmul.bf16.gmra.mxu0 %v351
  %v387 = vpop.f32.mrf.mxu0
  %v388 = vadd.f32 %v330, %v387
  %v389 = vpop.f32.mrf.mxu0
  %v390 = vadd.f32 %v330, %v389
  %391 = vmatmul.bf16.gmra.mxu0 %v354
  %v392 = vpop.f32.mrf.mxu0
  %v393 = vadd.f32 %v330, %v392
  %v394 = vpop.f32.mrf.mxu0
  %v395 = vadd.f32 %v330, %v394
  %396 = vmatmul.bf16.gmra.mxu0 %v357
  %v397 = vpop.f32.mrf.mxu0
  %v398 = vadd.f32 %v330, %v397
  %v399 = vpop.f32.mrf.mxu0
  %v400 = vadd.f32 %v330, %v399
  %401 = vmatmul.bf16.gmra.mxu0 %v360
  %v402 = vpop.f32.mrf.mxu0
  %v403 = vadd.f32 %v330, %v402
  %v404 = vpop.f32.mrf.mxu0
  %v405 = vadd.f32 %v330, %v404
  %406 = vmatmul.bf16.gmra.mxu0 %v363
  %v407 = vpop.f32.mrf.mxu0
  %v408 = vadd.f32 %v330, %v407
  %v409 = vpop.f32.mrf.mxu0
  %v410 = vadd.f32 %v330, %v409
  %411 = vmatmul.bf16.gmra.mxu0 %v366
  %v412 = vpop.f32.mrf.mxu0
  %v413 = vadd.f32 %v330, %v412
  %v414 = vpop.f32.mrf.mxu0
  %v415 = vadd.f32 %v330, %v414
  %416 = vdwg.mxu0
  %v417 = vmax.f32 %v378, 0.0
  %v418 = vmax.f32 %v380, 0.0
  %v419 = vmax.f32 %v383, 0.0
  %v420 = vmax.f32 %v385, 0.0
  %v421 = vmax.f32 %v388, 0.0
  %v422 = vmax.f32 %v390, 0.0
  %v423 = vmax.f32 %v393, 0.0
  %v424 = vmax.f32 %v395, 0.0
  %v425 = vmax.f32 %v398, 0.0
  %v426 = vmax.f32 %v400, 0.0
  %v427 = vmax.f32 %v403, 0.0
  %v428 = vmax.f32 %v405, 0.0
  %v429 = vmax.f32 %v408, 0.0
  %v430 = vmax.f32 %v410, 0.0
  %v431 = vmax.f32 %v413, 0.0
  %v432 = vmax.f32 %v415, 0.0
  %v433 = vpack.c.bf16 %v418, %v417
  %v434 = vpack.c.bf16 %v420, %v419
  %v435 = vpack.c.bf16 %v422, %v421
  %v436 = vpack.c.bf16 %v424, %v423
  %v437 = vpack.c.bf16 %v426, %v425
  %v438 = vpack.c.bf16 %v428, %v427
  %v439 = vpack.c.bf16 %v430, %v429
  %v440 = vpack.c.bf16 %v432, %v431
  %v441 = vld [vmem:[%s7] sm:$0xf]
  %v442 = vld [vmem:[%s7 + $0x4] sm:$0xf]
  %v443 = vld [vmem:[%s7 + $0x8] sm:$0xf]
  %v444 = vld [vmem:[%s7 + $0xc] sm:$0xf]
  %v445 = vld [vmem:[%s8] sm:$0x1]
  %v447 = vperm.slane %v445, 0
  %v453 = vunpack.c.l.b16 %v441
  %v454 = vunpack.c.l.b16 %v442
  %v455 = vunpack.c.l.b16 %v443
  %v456 = vunpack.c.l.b16 %v444
  %v457 = vpack.c.b16 %v454, %v453
  %v458 = vpack.c.b16 %v456, %v455
  %v462 = vsel %vm109, %v433, 0
  %v465 = vsel %vm109, %v434, 0
  %v468 = vsel %vm109, %v435, 0
  %v471 = vsel %vm109, %v436, 0
  %v474 = vsel %vm109, %v437, 0
  %v477 = vsel %vm109, %v438, 0
  %v480 = vsel %vm109, %v439, 0
  %v483 = vsel %vm109, %v440, 0
  %485 = vmatpush.bf16.msra.mxu0 0
  %486 = vmatpush.bf16.msra.mxu0 0
  %487 = vmatpush.bf16.msra.mxu0 0
  %488 = vmatpush.bf16.msra.mxu0 0
  %489 = vmatpush.bf16.msra.mxu0 0
  %490 = vmatpush.bf16.msra.mxu0 0
  %491 = vmatpush.bf16.msra.mxu0 %v458
  %492 = vmatpush.bf16.msra.mxu0 %v457
  %493 = vmatmul.bf16.gmra.mxu0 %v462
  %v494 = vpop.f32.mrf.mxu0
  %v495 = vadd.f32 %v447, %v494
  %v496 = vpop.f32.mrf.mxu0
  %v497 = vadd.f32 %v447, %v496
  %498 = vmatmul.bf16.gmra.mxu0 %v465
  %v499 = vpop.f32.mrf.mxu0
  %v500 = vadd.f32 %v447, %v499
  %v501 = vpop.f32.mrf.mxu0
  %v502 = vadd.f32 %v447, %v501
  %503 = vmatmul.bf16.gmra.mxu0 %v468
  %v504 = vpop.f32.mrf.mxu0
  %v505 = vadd.f32 %v447, %v504
  %v506 = vpop.f32.mrf.mxu0
  %v507 = vadd.f32 %v447, %v506
  %508 = vmatmul.bf16.gmra.mxu0 %v471
  %v509 = vpop.f32.mrf.mxu0
  %v510 = vadd.f32 %v447, %v509
  %v511 = vpop.f32.mrf.mxu0
  %v512 = vadd.f32 %v447, %v511
  %513 = vmatmul.bf16.gmra.mxu0 %v474
  %v514 = vpop.f32.mrf.mxu0
  %v515 = vadd.f32 %v447, %v514
  %v516 = vpop.f32.mrf.mxu0
  %v517 = vadd.f32 %v447, %v516
  %518 = vmatmul.bf16.gmra.mxu0 %v477
  %v519 = vpop.f32.mrf.mxu0
  %v520 = vadd.f32 %v447, %v519
  %v521 = vpop.f32.mrf.mxu0
  %v522 = vadd.f32 %v447, %v521
  %523 = vmatmul.bf16.gmra.mxu0 %v480
  %v524 = vpop.f32.mrf.mxu0
  %v525 = vadd.f32 %v447, %v524
  %v526 = vpop.f32.mrf.mxu0
  %v527 = vadd.f32 %v447, %v526
  %528 = vmatmul.bf16.gmra.mxu0 %v483
  %v529 = vpop.f32.mrf.mxu0
  %v530 = vadd.f32 %v447, %v529
  %v531 = vpop.f32.mrf.mxu0
  %v532 = vadd.f32 %v447, %v531
  %533 = vdwg.mxu0
  %v534 = vlaneseq
  %v535 = vand.u32 %v534, 127
  %vm536 = vcmp.eq.s32.totalorder %v535, 0
  %vm537 = vcmp.ne.f32.partialorder %v495, %v495
  %vm538 = vcmp.ne.f32.partialorder %v497, %v497
  %vm539 = vcmp.ne.f32.partialorder %v500, %v500
  %vm540 = vcmp.ne.f32.partialorder %v502, %v502
  %vm541 = vcmp.ne.f32.partialorder %v505, %v505
  %vm542 = vcmp.ne.f32.partialorder %v507, %v507
  %vm543 = vcmp.ne.f32.partialorder %v510, %v510
  %vm544 = vcmp.ne.f32.partialorder %v512, %v512
  %vm545 = vcmp.ne.f32.partialorder %v515, %v515
  %vm546 = vcmp.ne.f32.partialorder %v517, %v517
  %vm547 = vcmp.ne.f32.partialorder %v520, %v520
  %vm548 = vcmp.ne.f32.partialorder %v522, %v522
  %vm549 = vcmp.ne.f32.partialorder %v525, %v525
  %vm550 = vcmp.ne.f32.partialorder %v527, %v527
  %vm551 = vcmp.ne.f32.partialorder %v530, %v530
  %vm552 = vcmp.ne.f32.partialorder %v532, %v532
  %v553 = vsel %vm537, 0.0, %v495
  %v554 = vsel %vm538, 0.0, %v497
  %v555 = vsel %vm539, 0.0, %v500
  %v556 = vsel %vm540, 0.0, %v502
  %v557 = vsel %vm541, 0.0, %v505
  %v558 = vsel %vm542, 0.0, %v507
  %v559 = vsel %vm543, 0.0, %v510
  %v560 = vsel %vm544, 0.0, %v512
  %v561 = vsel %vm545, 0.0, %v515
  %v562 = vsel %vm546, 0.0, %v517
  %v563 = vsel %vm547, 0.0, %v520
  %v564 = vsel %vm548, 0.0, %v522
  %v565 = vsel %vm549, 0.0, %v525
  %v566 = vsel %vm550, 0.0, %v527
  %v567 = vsel %vm551, 0.0, %v530
  %v568 = vsel %vm552, 0.0, %v532
  %vm569 = vcmp.eq.f32.partialorder %v553, inf
  %vm570 = vcmp.eq.f32.partialorder %v554, inf
  %vm571 = vcmp.eq.f32.partialorder %v555, inf
  %vm572 = vcmp.eq.f32.partialorder %v556, inf
  %vm573 = vcmp.eq.f32.partialorder %v557, inf
  %vm574 = vcmp.eq.f32.partialorder %v558, inf
  %vm575 = vcmp.eq.f32.partialorder %v559, inf
  %vm576 = vcmp.eq.f32.partialorder %v560, inf
  %vm577 = vcmp.eq.f32.partialorder %v561, inf
  %vm578 = vcmp.eq.f32.partialorder %v562, inf
  %vm579 = vcmp.eq.f32.partialorder %v563, inf
  %vm580 = vcmp.eq.f32.partialorder %v564, inf
  %vm581 = vcmp.eq.f32.partialorder %v565, inf
  %vm582 = vcmp.eq.f32.partialorder %v566, inf
  %vm583 = vcmp.eq.f32.partialorder %v567, inf
  %vm584 = vcmp.eq.f32.partialorder %v568, inf
  %v585 = vsel %vm569, 3.4028235e+38, %v553
  %v586 = vsel %vm570, 3.4028235e+38, %v554
  %v587 = vsel %vm571, 3.4028235e+38, %v555
  %v588 = vsel %vm572, 3.4028235e+38, %v556
  %v589 = vsel %vm573, 3.4028235e+38, %v557
  %v590 = vsel %vm574, 3.4028235e+38, %v558
  %v591 = vsel %vm575, 3.4028235e+38, %v559
  %v592 = vsel %vm576, 3.4028235e+38, %v560
  %v593 = vsel %vm577, 3.4028235e+38, %v561
  %v594 = vsel %vm578, 3.4028235e+38, %v562
  %v595 = vsel %vm579, 3.4028235e+38, %v563
  %v596 = vsel %vm580, 3.4028235e+38, %v564
  %v597 = vsel %vm581, 3.4028235e+38, %v565
  %v598 = vsel %vm582, 3.4028235e+38, %v566
  %v599 = vsel %vm583, 3.4028235e+38, %v567
  %v600 = vsel %vm584, 3.4028235e+38, %v568
  %vm601 = vcmp.eq.f32.partialorder %v585, -inf
  %vm602 = vcmp.eq.f32.partialorder %v586, -inf
  %vm603 = vcmp.eq.f32.partialorder %v587, -inf
  %vm604 = vcmp.eq.f32.partialorder %v588, -inf
  %vm605 = vcmp.eq.f32.partialorder %v589, -inf
  %vm606 = vcmp.eq.f32.partialorder %v590, -inf
  %vm607 = vcmp.eq.f32.partialorder %v591, -inf
  %vm608 = vcmp.eq.f32.partialorder %v592, -inf
  %vm609 = vcmp.eq.f32.partialorder %v593, -inf
  %vm610 = vcmp.eq.f32.partialorder %v594, -inf
  %vm611 = vcmp.eq.f32.partialorder %v595, -inf
  %vm612 = vcmp.eq.f32.partialorder %v596, -inf
  %vm613 = vcmp.eq.f32.partialorder %v597, -inf
  %vm614 = vcmp.eq.f32.partialorder %v598, -inf
  %vm615 = vcmp.eq.f32.partialorder %v599, -inf
  %vm616 = vcmp.eq.f32.partialorder %v600, -inf
  %v617 = vsel %vm601, -3.4028235e+38, %v585
  %v618 = vsel %vm602, -3.4028235e+38, %v586
  %v619 = vsel %vm603, -3.4028235e+38, %v587
  %v620 = vsel %vm604, -3.4028235e+38, %v588
  %v621 = vsel %vm605, -3.4028235e+38, %v589
  %v622 = vsel %vm606, -3.4028235e+38, %v590
  %v623 = vsel %vm607, -3.4028235e+38, %v591
  %v624 = vsel %vm608, -3.4028235e+38, %v592
  %v625 = vsel %vm609, -3.4028235e+38, %v593
  %v626 = vsel %vm610, -3.4028235e+38, %v594
  %v627 = vsel %vm611, -3.4028235e+38, %v595
  %v628 = vsel %vm612, -3.4028235e+38, %v596
  %v629 = vsel %vm613, -3.4028235e+38, %v597
  %v630 = vsel %vm614, -3.4028235e+38, %v598
  %v631 = vsel %vm615, -3.4028235e+38, %v599
  %v632 = vsel %vm616, -3.4028235e+38, %v600
  %v633 = vsel %vm536, %v617, %v495
  %v634 = vsel %vm536, %v618, %v497
  %v635 = vsel %vm536, %v619, %v500
  %v636 = vsel %vm536, %v620, %v502
  %v637 = vsel %vm536, %v621, %v505
  %v638 = vsel %vm536, %v622, %v507
  %v639 = vsel %vm536, %v623, %v510
  %v640 = vsel %vm536, %v624, %v512
  %v641 = vsel %vm536, %v625, %v515
  %v642 = vsel %vm536, %v626, %v517
  %v643 = vsel %vm536, %v627, %v520
  %v644 = vsel %vm536, %v628, %v522
  %v645 = vsel %vm536, %v629, %v525
  %v646 = vsel %vm536, %v630, %v527
  %v647 = vsel %vm536, %v631, %v530
  %v648 = vsel %vm536, %v632, %v532
  %vm649 = vcmask 15360
  %650 = vst.msk [vmem:[%s9] sm:$0xff] %vm649, %v633
  %651 = vst.msk [vmem:[%s9 + $0x8] sm:$0xff] %vm649, %v634
  %652 = vst.msk [vmem:[%s9 + $0x10] sm:$0xff] %vm649, %v635
  %653 = vst.msk [vmem:[%s9 + $0x18] sm:$0xff] %vm649, %v636
  %654 = vst.msk [vmem:[%s9 + $0x20] sm:$0xff] %vm649, %v637
  %655 = vst.msk [vmem:[%s9 + $0x28] sm:$0xff] %vm649, %v638
  %656 = vst.msk [vmem:[%s9 + $0x30] sm:$0xff] %vm649, %v639
  %657 = vst.msk [vmem:[%s9 + $0x38] sm:$0xff] %vm649, %v640
  %658 = vst.msk [vmem:[%s9 + $0x40] sm:$0xff] %vm649, %v641
  %659 = vst.msk [vmem:[%s9 + $0x48] sm:$0xff] %vm649, %v642
  %660 = vst.msk [vmem:[%s9 + $0x50] sm:$0xff] %vm649, %v643
  %661 = vst.msk [vmem:[%s9 + $0x58] sm:$0xff] %vm649, %v644
  %662 = vst.msk [vmem:[%s9 + $0x60] sm:$0xff] %vm649, %v645
  %663 = vst.msk [vmem:[%s9 + $0x68] sm:$0xff] %vm649, %v646
  %664 = vst.msk [vmem:[%s9 + $0x70] sm:$0xff] %vm649, %v647
  %665 = vst.msk [vmem:[%s9 + $0x78] sm:$0xff] %vm649, %v648
  // Predicated region
  $region38: #{tpu_custom_call.1} parent=0 // pred_check
    _
  $region39: #{tpu_custom_call.1} parent=0 // pred_check_branch
    %667 = sbr.rel (0) target = $region41
  $region40: #{tpu_custom_call.1} parent=0 // pred_region
    _
  $region41: #{tpu_custom_call.1} parent=0 // pred_fallthru
    _
  // Predicated region
  $region42: #{tpu_custom_call.1} parent=0 // pred_check
    _
  $region43: #{tpu_custom_call.1} parent=0 // pred_check_branch
    %669 = sbr.rel (0) target = $region45
  $region44: #{tpu_custom_call.1} parent=0 // pred_region
    _
  $region45: #{tpu_custom_call.1} parent=0 // pred_fallthru
    _

</llo_original>
